<compile_context>
chip_gen: v7x
topology: tpu7x:2x2x1
jax: 0.10.0
libtpu: 0.0.40
codegen_flags: <defaults>
</compile_context>

<pallas_src>
import jax
import jax.numpy as jnp
from jax.experimental import pallas as pl
from jax.experimental.pallas import tpu as pltpu


def _round_up(a: int, m: int) -> int:
    return (a + m - 1) // m * m


def mixed_kernel(w_ref, x_ref, W_ref, b_ref, o_ref):
    """One node tile of the collapsed Mixed op.

    w_ref: (K,)      f32 softmaxed arch weights (SMEM, scalar prefetch)
    x_ref: (tn, D)   f32 node-feature tile (streamed over the grid)
    W_ref: (K, D, D) f32 candidate weights (VMEM resident, constant block idx)
    b_ref: (K, 1, D) f32 candidate biases  (VMEM resident)
    o_ref: (tn, D)   output tile (bf16 by default)
    """
    K = W_ref.shape[0]
    # Exact linear collapse: W_eff = sum_k w[k]*W[k].  K*D^2 VPU mul-adds per
    # grid step (~40 cycles at K=4, D=128) -- recomputed every step so it is
    # correct under megacore "parallel" scheduling (no cross-step scratch
    # init) and hides completely under the x-tile DMA.
    w_eff = w_ref[0] * W_ref[0]
    b_eff = w_ref[0] * b_ref[0]
    for k in range(1, K):
        w_eff = w_eff + w_ref[k] * W_ref[k]
        b_eff = b_eff + w_ref[k] * b_ref[k]

    # bf16 MXU matmul with f32 accumulation.  x is DMA'd once in f32 and cast
    # in-kernel (free VPU slots under the MXU) -- no wrapper-side cast pass.
    y = jnp.dot(x_ref[...].astype(jnp.bfloat16),
                w_eff.astype(jnp.bfloat16),
                preferred_element_type=jnp.float32)
    # f32 epilogue (v5e-safe: no bf16 VALU there); only the final store narrows.
    o_ref[...] = (y + b_eff).astype(o_ref.dtype)


def mixed_forward(x, W, b, arch_weight, *, tn=512, out_dtype=jnp.bfloat16):
    """x: [N, D] node features, W: [K, D, D], b: [K, D], arch_weight: [K].

    Computes softmax(arch_weight)-weighted sum of the K affine candidates in a
    single fused Pallas kernel.  out_dtype defaults to bf16 (halves the largest
    HBM stream); pass out_dtype=x.dtype for exact dtype parity with PyTorch.
    """
    N, D = x.shape
    K = W.shape[0]
    assert W.shape == (K, D, D) and b.shape == (K, D) and arch_weight.shape == (K,)

    x = x.astype(jnp.float32)
    W = W.astype(jnp.float32)
    b = b.astype(jnp.float32).reshape(K, 1, D)

    # softmax over K scalars only (negligible host-side work);
    # the K-combine itself runs inside the kernel.
    w_soft = jax.nn.softmax(arch_weight.astype(jnp.float32), axis=0)

    # --- node-axis tiling: large tiles (kernel is HBM/latency-bound; per-step
    # overhead dominates tiny tiles), cdiv grid + zero padding so arbitrary
    # graph node counts keep lane-dense (8,128)-aligned blocks, and >=2 grid
    # steps when possible so both v7x TensorCores get work.
    n_al = _round_up(N, 8)
    tn = _round_up(max(8, min(tn, n_al)), 8)
    if n_al >= 512 and pl.cdiv(n_al, tn) < 2:
        tn = _round_up(pl.cdiv(n_al, 2), 8)
    grid_n = pl.cdiv(n_al, tn)
    tn = _round_up(pl.cdiv(n_al, grid_n), 8)   # rebalance tiles -> minimal padding
    n_pad = grid_n * tn
    if n_pad != N:
        x = jnp.pad(x, ((0, n_pad - N), (0, 0)))

    out_bytes = jnp.dtype(out_dtype).itemsize
    cost = pl.CostEstimate(
        flops=2 * n_pad * D * D,
        transcendentals=0,
        bytes_accessed=n_pad * D * (4 + out_bytes) + K * D * D * 4 + K * D * 4,
    )

    # NOTE: W/b blocks have a constant index_map; at D=128 the (wasted) second
    # pipeline buffer is only ~256 KiB so pl.Buffered(1) is intentionally not
    # used.  Revisit if D grows into the MiB range on v7x's 64 MiB VMEM.
    out = pl.pallas_call(
        mixed_kernel,
        out_shape=jax.ShapeDtypeStruct((n_pad, D), out_dtype),
        grid_spec=pltpu.PrefetchScalarGridSpec(
            num_scalar_prefetch=1,                              # w_soft -> SMEM
            grid=(grid_n,),
            in_specs=[
                pl.BlockSpec((tn, D), lambda n, w: (n, 0)),       # x tile streamed
                pl.BlockSpec((K, D, D), lambda n, w: (0, 0, 0)),  # W resident
                pl.BlockSpec((K, 1, D), lambda n, w: (0, 0, 0)),  # b resident
            ],
            out_specs=pl.BlockSpec((tn, D), lambda n, w: (n, 0)),
        ),
        compiler_params=pltpu.CompilerParams(
            dimension_semantics=("parallel",),     # node tiles split across TCs
            vmem_limit_bytes=32 * 1024 * 1024,     # headroom for larger tn sweeps
        ),
        cost_estimate=cost,
    )(w_soft, x, W, b)
    return out[:N]


if __name__ == "__main__":
    key = jax.random.PRNGKey(0)
    k_x, k_w2, k_w3, k_b2, k_b3, k_arch = jax.random.split(key, 6)

    # Graph nodes x node_dim.  N deliberately not a multiple of the tile so the
    # cdiv + padding path is exercised; grid ends up with 2 steps (v7x megacore).
    N, D = 1000, 128
    ops = ["V_None", "V_I", "V_Dense", "V_Sparse"]
    K = len(ops)

    x = jax.random.normal(k_x, (N, D), dtype=jnp.float32)

    # Deterministic candidate parameters (V_Package fc), stacked along K.
    W = jnp.stack([
        jnp.zeros((D, D), jnp.float32),                       # V_None
        jnp.eye(D, dtype=jnp.float32),                        # V_I
        jax.random.normal(k_w2, (D, D), jnp.float32) * 0.05,  # V_Dense
        jax.random.normal(k_w3, (D, D), jnp.float32) * 0.05,  # V_Sparse
    ])
    b = jnp.stack([
        jnp.zeros((D,), jnp.float32),
        jnp.zeros((D,), jnp.float32),
        jax.random.normal(k_b2, (D,), jnp.float32) * 0.05,
        jax.random.normal(k_b3, (D,), jnp.float32) * 0.05,
    ])
    arch_weight = jax.random.normal(k_arch, (K,), dtype=jnp.float32)

    out = jax.block_until_ready(mixed_forward(x, W, b, arch_weight))
    assert out.shape == (N, D) and out.dtype == jnp.bfloat16
    out_f32 = out.astype(jnp.float32)

    # --- references ---
    w_soft = jax.nn.softmax(arch_weight, axis=0)

    # (a) bf16-consistent reference: same input rounding / output store as kernel.
    W_eff = jnp.einsum("k,kij->ij", w_soft, W)
    b_eff = jnp.einsum("k,kj->j", w_soft, b)
    ref_bf = jnp.dot(x.astype(jnp.bfloat16), W_eff.astype(jnp.bfloat16),
                     preferred_element_type=jnp.float32) + b_eff[None, :]
    ref_bf = ref_bf.astype(jnp.bfloat16).astype(jnp.float32)
    assert jnp.allclose(out_f32, ref_bf, atol=1e-2, rtol=5e-2), "mismatch vs bf16 ref"

    # (b) exact f32 per-op reference of the original Mixed semantics
    #     (tolerance covers bf16 matmul inputs + bf16 output store).
    ref_exact = sum(w_soft[i] * (x @ W[i] + b[i][None, :]) for i in range(K))
    assert jnp.allclose(out_f32, ref_exact, atol=3e-2, rtol=3e-2), "mismatch vs exact ref"

    print("KERNEL_OK")
</pallas_src>

<mosaic_0001>
module attributes {stable_mosaic.version = 11 : i64} {
  func.func @mixed_kernel(%arg0: i32, %arg1: memref<4xf32, #tpu.memory_space<smem>>, %arg2: memref<504x128xf32, #tpu.memory_space<vmem>>, %arg3: memref<4x128x128xf32, #tpu.memory_space<vmem>>, %arg4: memref<4x1x128xf32, #tpu.memory_space<vmem>>, %arg5: memref<504x128xbf16, #tpu.memory_space<vmem>>) attributes {dimension_semantics = [#tpu.dimension_semantics<parallel>], iteration_bounds = array<i64: 2>, scalar_prefetch = 1 : i64, scratch_operands = 0 : i64, tpu.core_type = #tpu.core_type<tc>, window_params = [{transform_indices = @transform_0, window_bounds = array<i64: 504, 128>}, {pipeline_mode = #tpu.pipeline_mode<synchronous>, transform_indices = @transform_1, window_bounds = array<i64: 4, 128, 128>}, {pipeline_mode = #tpu.pipeline_mode<synchronous>, transform_indices = @transform_2, window_bounds = array<i64: 4, 1, 128>}, {transform_indices = @transform_3, window_bounds = array<i64: 504, 128>}]} {
    %c0 = arith.constant 0 : index
    %0 = memref.load %arg1[%c0] : memref<4xf32, #tpu.memory_space<smem>>
    %c0_0 = arith.constant 0 : index
    %c0_1 = arith.constant 0 : index
    %c0_2 = arith.constant 0 : index
    %1 = vector.load %arg3[%c0_0, %c0_1, %c0_2] : memref<4x128x128xf32, #tpu.memory_space<vmem>>, vector<1x128x128xf32>
    %2 = vector.shape_cast %1 : vector<1x128x128xf32> to vector<128x128xf32>
    %3 = vector.broadcast %0 : f32 to vector<128x128xf32>
    %4 = arith.mulf %3, %2 : vector<128x128xf32>
    %c0_3 = arith.constant 0 : index
    %5 = memref.load %arg1[%c0_3] : memref<4xf32, #tpu.memory_space<smem>>
    %c0_4 = arith.constant 0 : index
    %c0_5 = arith.constant 0 : index
    %c0_6 = arith.constant 0 : index
    %6 = vector.load %arg4[%c0_4, %c0_5, %c0_6] : memref<4x1x128xf32, #tpu.memory_space<vmem>>, vector<1x1x128xf32>
    %7 = vector.shape_cast %6 : vector<1x1x128xf32> to vector<1x128xf32>
    %8 = vector.broadcast %5 : f32 to vector<1x128xf32>
    %9 = arith.mulf %8, %7 : vector<1x128xf32>
    %c1 = arith.constant 1 : index
    %10 = memref.load %arg1[%c1] : memref<4xf32, #tpu.memory_space<smem>>
    %c1_7 = arith.constant 1 : index
    %c0_8 = arith.constant 0 : index
    %c0_9 = arith.constant 0 : index
    %11 = vector.load %arg3[%c1_7, %c0_8, %c0_9] : memref<4x128x128xf32, #tpu.memory_space<vmem>>, vector<1x128x128xf32>
    %12 = vector.shape_cast %11 : vector<1x128x128xf32> to vector<128x128xf32>
    %13 = vector.broadcast %10 : f32 to vector<128x128xf32>
    %14 = arith.mulf %13, %12 : vector<128x128xf32>
    %15 = arith.addf %4, %14 : vector<128x128xf32>
    %c1_10 = arith.constant 1 : index
    %16 = memref.load %arg1[%c1_10] : memref<4xf32, #tpu.memory_space<smem>>
    %c1_11 = arith.constant 1 : index
    %c0_12 = arith.constant 0 : index
    %c0_13 = arith.constant 0 : index
    %17 = vector.load %arg4[%c1_11, %c0_12, %c0_13] : memref<4x1x128xf32, #tpu.memory_space<vmem>>, vector<1x1x128xf32>
    %18 = vector.shape_cast %17 : vector<1x1x128xf32> to vector<1x128xf32>
    %19 = vector.broadcast %16 : f32 to vector<1x128xf32>
    %20 = arith.mulf %19, %18 : vector<1x128xf32>
    %21 = arith.addf %9, %20 : vector<1x128xf32>
    %c2 = arith.constant 2 : index
    %22 = memref.load %arg1[%c2] : memref<4xf32, #tpu.memory_space<smem>>
    %c2_14 = arith.constant 2 : index
    %c0_15 = arith.constant 0 : index
    %c0_16 = arith.constant 0 : index
    %23 = vector.load %arg3[%c2_14, %c0_15, %c0_16] : memref<4x128x128xf32, #tpu.memory_space<vmem>>, vector<1x128x128xf32>
    %24 = vector.shape_cast %23 : vector<1x128x128xf32> to vector<128x128xf32>
    %25 = vector.broadcast %22 : f32 to vector<128x128xf32>
    %26 = arith.mulf %25, %24 : vector<128x128xf32>
    %27 = arith.addf %15, %26 : vector<128x128xf32>
    %c2_17 = arith.constant 2 : index
    %28 = memref.load %arg1[%c2_17] : memref<4xf32, #tpu.memory_space<smem>>
    %c2_18 = arith.constant 2 : index
    %c0_19 = arith.constant 0 : index
    %c0_20 = arith.constant 0 : index
    %29 = vector.load %arg4[%c2_18, %c0_19, %c0_20] : memref<4x1x128xf32, #tpu.memory_space<vmem>>, vector<1x1x128xf32>
    %30 = vector.shape_cast %29 : vector<1x1x128xf32> to vector<1x128xf32>
    %31 = vector.broadcast %28 : f32 to vector<1x128xf32>
    %32 = arith.mulf %31, %30 : vector<1x128xf32>
    %33 = arith.addf %21, %32 : vector<1x128xf32>
    %c3 = arith.constant 3 : index
    %34 = memref.load %arg1[%c3] : memref<4xf32, #tpu.memory_space<smem>>
    %c3_21 = arith.constant 3 : index
    %c0_22 = arith.constant 0 : index
    %c0_23 = arith.constant 0 : index
    %35 = vector.load %arg3[%c3_21, %c0_22, %c0_23] : memref<4x128x128xf32, #tpu.memory_space<vmem>>, vector<1x128x128xf32>
    %36 = vector.shape_cast %35 : vector<1x128x128xf32> to vector<128x128xf32>
    %37 = vector.broadcast %34 : f32 to vector<128x128xf32>
    %38 = arith.mulf %37, %36 : vector<128x128xf32>
    %39 = arith.addf %27, %38 : vector<128x128xf32>
    %c3_24 = arith.constant 3 : index
    %40 = memref.load %arg1[%c3_24] : memref<4xf32, #tpu.memory_space<smem>>
    %c3_25 = arith.constant 3 : index
    %c0_26 = arith.constant 0 : index
    %c0_27 = arith.constant 0 : index
    %41 = vector.load %arg4[%c3_25, %c0_26, %c0_27] : memref<4x1x128xf32, #tpu.memory_space<vmem>>, vector<1x1x128xf32>
    %42 = vector.shape_cast %41 : vector<1x1x128xf32> to vector<1x128xf32>
    %43 = vector.broadcast %40 : f32 to vector<1x128xf32>
    %44 = arith.mulf %43, %42 : vector<1x128xf32>
    %45 = arith.addf %33, %44 : vector<1x128xf32>
    %c0_28 = arith.constant 0 : index
    %c0_29 = arith.constant 0 : index
    %46 = vector.load %arg2[%c0_28, %c0_29] : memref<504x128xf32, #tpu.memory_space<vmem>>, vector<504x128xf32>
    %47 = arith.truncf %46 : vector<504x128xf32> to vector<504x128xbf16>
    %48 = arith.truncf %39 : vector<128x128xf32> to vector<128x128xbf16>
    %cst = arith.constant dense<0.000000e+00> : vector<504x128xf32>
    %49 = tpu.matmul %47, %48, %cst {dimension_numbers = #tpu.dot_dimension_numbers<[1], [0], [0], [1], [0, 0, 1, 1], [], []>} : vector<504x128xbf16>, vector<128x128xbf16>, vector<504x128xf32> -> vector<504x128xf32>
    %50 = vector.broadcast %45 : vector<1x128xf32> to vector<504x128xf32>
    %51 = arith.addf %49, %50 : vector<504x128xf32>
    %52 = arith.truncf %51 : vector<504x128xf32> to vector<504x128xbf16>
    %c0_30 = arith.constant 0 : index
    %c0_31 = arith.constant 0 : index
    %53 = vector.load %arg5[%c0_30, %c0_31] : memref<504x128xbf16, #tpu.memory_space<vmem>>, vector<504x128xbf16>
    tpu.vector_store %arg5[%c0_30, %c0_31], %52 {strides = array<i32>} : memref<504x128xbf16, #tpu.memory_space<vmem>>, vector<504x128xbf16>,
    return
  }
  func.func @transform_0(%arg0: i32, %arg1: memref<4xf32, #tpu.memory_space<smem>>) -> (i32, i32) {
    %c0_i32 = arith.constant 0 : i32
    %c0_i32_0 = arith.constant 0 : i32
    return %arg0, %c0_i32 : i32, i32
  }
  func.func @transform_1(%arg0: i32, %arg1: memref<4xf32, #tpu.memory_space<smem>>) -> (i32, i32, i32) {
    %c0_i32 = arith.constant 0 : i32
    %c0_i32_0 = arith.constant 0 : i32
    %c0_i32_1 = arith.constant 0 : i32
    %c0_i32_2 = arith.constant 0 : i32
    return %c0_i32, %c0_i32_0, %c0_i32_1 : i32, i32, i32
  }
  func.func @transform_2(%arg0: i32, %arg1: memref<4xf32, #tpu.memory_space<smem>>) -> (i32, i32, i32) {
    %c0_i32 = arith.constant 0 : i32
    %c0_i32_0 = arith.constant 0 : i32
    %c0_i32_1 = arith.constant 0 : i32
    %c0_i32_2 = arith.constant 0 : i32
    return %c0_i32, %c0_i32_0, %c0_i32_1 : i32, i32, i32
  }
  func.func @transform_3(%arg0: i32, %arg1: memref<4xf32, #tpu.memory_space<smem>>) -> (i32, i32) {
    %c0_i32 = arith.constant 0 : i32
    %c0_i32_0 = arith.constant 0 : i32
    return %arg0, %c0_i32 : i32, i32
  }
}

</mosaic_0001>

<llo_original>
// kernel: tpu_custom_call.1
$region0: #{tpu_custom_call.1}
  #allocation0 [shape = 'u32[]', space=smem, size = 0x4, offset = 0x4, fixed_abs, tag = 'smem constant byte address 0x4 - core index']
  #allocation1 [shape = 'u32[144,128]{1,0:T(1,128)}', space=vmem, size = 0x12000, scoped, tag = 'internal scratch']
  #allocation2 [shape = 's32[1]{0}', space=sflag, size = 0x4, scoped, tag = 'scoped memory for tpu_custom_call.1']
  #allocation3 [shape = 'u8[512]{0}', space=smem, size = 0x200, scoped, tag = 'prefetched SMEM operand 0']
  %s0 = inlined_call_operand.hbm [shape: f32[4], index: 0, kind: input, shape index: {}]
  %s1 = inlined_call_operand.hbm [shape: f32[1008,128], index: 1, kind: input, shape index: {}]
  %s2 = inlined_call_operand.hbm [shape: f32[4,128,128], index: 2, kind: input, shape index: {}]
  %s3 = inlined_call_operand.vmem [shape: f32[4,1,128], index: 3, kind: input, shape index: {}]
  %s4 = inlined_call_operand.hbm [shape: bf16[1008,128], index: 4, kind: output, shape index: {}]
  %s5 = sld [smem:[#allocation0]]
  $region53: #{tpu_custom_call.1} parent=0
    _
  %s7 = ssub.s32 1, %s5
  %s8 = scalar_select 0, %s7, %s5
  %10 = dma.hbm_to_smem %s0, 16, [#allocation3], [#allocation2]
  %11 = dma.done [#allocation2], 16
  %12 = sfence
  $region1: #{tpu_custom_call.1} parent=0
    #allocation4 [shape = 'u8[516096]{0}', space=vmem, size = 0x7e000, scoped, tag = 'input window, operand 1']
    #allocation5 [shape = 's32[2]{0}', space=sflag, size = 0x8, scoped, tag = 'scoped memory for tpu_custom_call.1']
    #allocation6 [shape = 's32[2]{0}', space=sflag, size = 0x8, scoped, tag = 'scoped memory for tpu_custom_call.1']
    #allocation7 [shape = 'u8[262144]{0}', space=vmem, size = 0x40000, scoped, tag = 'input window, operand 2, single buffered']
    #allocation8 [shape = 's32[1]{0}', space=sflag, size = 0x4, scoped, tag = 'scoped memory for tpu_custom_call.1']
    #allocation9 [shape = 'u8[258048]{0}', space=vmem, size = 0x3f000, scoped, tag = 'output window, operand 0']
    %13 = vsyncpa [#allocation5], 0
    %s14 = scalar_lea.sflag [#allocation5], 1
    %15 = vsyncpa %s14, 0
    %16 = vsyncpa [#allocation8], 0
    %17 = vsyncpa [#allocation6], 0
    %s18 = scalar_lea.sflag [#allocation6], 1
    %19 = vsyncpa %s18, 0
    loop: start=0, step=1, limit=4
    $region2: #{tpu_custom_call.1} parent=1 // loop_pre_header
      _
    $region3: #{tpu_custom_call.1} parent=1 // loop_header
      %s21 = sphi 0, %s25
      %p22 = scmp.ge.s32.totalorder %s21, 4
      %s31 = sphi 0, %s33
      %s34 = sphi 0, %s31
      %s35 = sphi 0, %s34
      %s51 = sphi 0, %s35
      %s55 = sphi 0, %s55
      %s57 = sphi 0, %s55
      %s58 = sphi 0, %s57
      %s72 = sphi 0, %s58
      %s76 = sphi 0, %s76
      %s78 = sphi 0, %s76
      %s79 = sphi 0, %s78
      %s93 = sphi 0, %s79
      %s99 = sphi 0, %s101
      %s102 = sphi 0, %s99
      %s103 = sphi 0, %s102
      %s119 = sphi 0, %s103
    $region4: #{tpu_custom_call.1} parent=1 // loop_header_branch
      %24 = sbr.rel (%p22) target = $region8
    $region5: #{tpu_custom_call.1} parent=1 // loop_body
      %s26 = ssub.s32 %s21, 1
      %s27 = ssub.s32 %s21, 2
      %s28 = sadd.s32 %s21, 1
      %s29 = ssub.s32 %s21, %s28
      %p30 = scmp.eq.s32.totalorder %s29, 0
      %s32 = sadd.s32 %s31, 1
      %s33 = scalar_select %p30, %s31, %s32
      %p36 = pneg %p30
      %p37 = scmp.eq.s32.totalorder %s21, 1
      %p38 = por %p36, %p37
      %p39 = scmp.ne.s32.totalorder %s31, %s34
      %p40 = scmp.eq.s32.totalorder %s21, 0
      %p41 = por %p39, %p40
      %p42 = scmp.ne.s32.totalorder %s31, %s34
      %p43 = scmp.eq.s32.totalorder %s26, 1
      %p44 = por %p42, %p43
      %p45 = scmp.ne.s32.totalorder %s34, %s35
      %p46 = scmp.eq.s32.totalorder %s26, 0
      %p47 = por %p45, %p46
      %p48 = scmp.ne.s32.totalorder %s34, %s35
      %p49 = scmp.eq.s32.totalorder %s27, 1
      %p50 = por %p48, %p49
      %p52 = scmp.ne.s32.totalorder %s35, %s51
      %p53 = scmp.eq.s32.totalorder %s27, 0
      %p54 = por %p52, %p53
      %s56 = sadd.s32 %s55, 1
      %p59 = scmp.eq.s32.totalorder %s21, 1
      %p60 = scmp.ne.s32.totalorder %s55, %s57
      %p61 = scmp.eq.s32.totalorder %s21, 0
      %p62 = por %p60, %p61
      %p63 = scmp.ne.s32.totalorder %s55, %s57
      %p64 = scmp.eq.s32.totalorder %s26, 1
      %p65 = por %p63, %p64
      %p66 = scmp.ne.s32.totalorder %s57, %s58
      %p67 = scmp.eq.s32.totalorder %s26, 0
      %p68 = por %p66, %p67
      %p69 = scmp.ne.s32.totalorder %s57, %s58
      %p70 = scmp.eq.s32.totalorder %s27, 1
      %p71 = por %p69, %p70
      %p73 = scmp.ne.s32.totalorder %s58, %s72
      %p74 = scmp.eq.s32.totalorder %s27, 0
      %p75 = por %p73, %p74
      %s77 = sadd.s32 %s76, 1
      %p80 = scmp.eq.s32.totalorder %s21, 1
      %p81 = scmp.ne.s32.totalorder %s76, %s78
      %p82 = scmp.eq.s32.totalorder %s21, 0
      %p83 = por %p81, %p82
      %p84 = scmp.ne.s32.totalorder %s76, %s78
      %p85 = scmp.eq.s32.totalorder %s26, 1
      %p86 = por %p84, %p85
      %p87 = scmp.ne.s32.totalorder %s78, %s79
      %p88 = scmp.eq.s32.totalorder %s26, 0
      %p89 = por %p87, %p88
      %p90 = scmp.ne.s32.totalorder %s78, %s79
      %p91 = scmp.eq.s32.totalorder %s27, 1
      %p92 = por %p90, %p91
      %p94 = scmp.ne.s32.totalorder %s79, %s93
      %p95 = scmp.eq.s32.totalorder %s27, 0
      %p96 = por %p94, %p95
      %s97 = ssub.s32 %s21, %s28
      %p98 = scmp.eq.s32.totalorder %s97, 0
      %s100 = sadd.s32 %s99, 1
      %s101 = scalar_select %p98, %s99, %s100
      %p104 = pneg %p98
      %p105 = scmp.eq.s32.totalorder %s21, 1
      %p106 = por %p104, %p105
      %p107 = scmp.ne.s32.totalorder %s99, %s102
      %p108 = scmp.eq.s32.totalorder %s21, 0
      %p109 = por %p107, %p108
      %p110 = scmp.ne.s32.totalorder %s99, %s102
      %p111 = scmp.eq.s32.totalorder %s26, 1
      %p112 = por %p110, %p111
      %p113 = scmp.ne.s32.totalorder %s102, %s103
      %p114 = scmp.eq.s32.totalorder %s26, 0
      %p115 = por %p113, %p114
      %p116 = scmp.ne.s32.totalorder %s102, %s103
      %p117 = scmp.eq.s32.totalorder %s27, 1
      %p118 = por %p116, %p117
      %p120 = scmp.ne.s32.totalorder %s103, %s119
      %p121 = scmp.eq.s32.totalorder %s27, 0
      %p122 = por %p120, %p121
      %p123 = scmp.le.s32.totalorder 1, %s21
      %p124 = scmp.lt.s32.totalorder %s21, 3
      %p125 = pnand %p123, %p124
      %p126 = pneg %p125
      // Predicated region
      $region9: #{tpu_custom_call.1} parent=5 // pred_check
        _
      $region10: #{tpu_custom_call.1} parent=5 // pred_check_branch
        %128 = sbr.rel (%p125) target = $region12
      $region11: #{tpu_custom_call.1} parent=5 // pred_region
        %s129 = ssub.s32 %s21, 1
        // Predicated region
        $region13: #{tpu_custom_call.1} parent=11 // pred_check
          %p130 = pneg %p68
        $region14: #{tpu_custom_call.1} parent=11 // pred_check_branch
          %132 = sbr.rel (%p130) target = $region16
        $region15: #{tpu_custom_call.1} parent=11 // pred_region
          %s134 = ssub.s32 8192, 8192
          %135 = vsyncadd [#allocation8], %s134
          %s136 = sshll.u32 [#allocation7], 4
          %s137 = int_to_ptr.vmem [resolvable:$true] %s136
          %142 = dma.hbm_to_vmem [thread:$0]  %s2, 8192, %s137, [#allocation8], 128, 128, 8
        $region16: #{tpu_custom_call.1} parent=11 // pred_fallthru
          _
        // Predicated region
        $region17: #{tpu_custom_call.1} parent=11 // pred_check
          %p143 = pneg %p89
        $region18: #{tpu_custom_call.1} parent=11 // pred_check_branch
          %145 = sbr.rel (%p143) target = $region20
        $region19: #{tpu_custom_call.1} parent=11 // pred_region
          _
        $region20: #{tpu_custom_call.1} parent=11 // pred_fallthru
          _
      $region12: #{tpu_custom_call.1} parent=5 // pred_fallthru
        _
      %p146 = scmp.lt.s32.totalorder %s21, 2
      // Predicated region
      $region21: #{tpu_custom_call.1} parent=5 // pred_check
        %p147 = pneg %p146
      $region22: #{tpu_custom_call.1} parent=5 // pred_check_branch
        %149 = sbr.rel (%p147) target = $region24
      $region23: #{tpu_custom_call.1} parent=5 // pred_region
        // Predicated region
        $region25: #{tpu_custom_call.1} parent=23 // pred_check
          %p150 = pneg %p41
        $region26: #{tpu_custom_call.1} parent=23 // pred_check_branch
          %152 = sbr.rel (%p150) target = $region28
        $region27: #{tpu_custom_call.1} parent=23 // pred_region
          %s153 = sand.u32 %s31, 1
          %s154 = scalar_lea.sflag [#allocation5], %s153
          %s155 = sand.u32 %s31, 1
          %s156 = smul.addr %s155, 504
          %s157 = scalar_lea.vmem [#allocation4], %s156
          %s158 = smul.u32 63, %s21
          %s160 = ssub.s32 8064, 8064
          %161 = vsyncadd %s154, %s160
          %s162 = smul.addr %s158, 128
          %s163 = scalar_lea.hbm %s1, %s162
          %s164 = sshll.u32 %s157, 4
          %s165 = int_to_ptr.vmem [resolvable:$true] %s164
          %170 = dma.hbm_to_vmem [thread:$0]  %s163, 8064, %s165, %s154, 128, 128, 8
        $region28: #{tpu_custom_call.1} parent=23 // pred_fallthru
          _
      $region24: #{tpu_custom_call.1} parent=5 // pred_fallthru
        _
      %p171 = scmp.le.s32.totalorder 1, %s21
      %p172 = scmp.lt.s32.totalorder %s21, 3
      %p173 = pnand %p171, %p172
      %p174 = pneg %p173
      // Predicated region
      $region29: #{tpu_custom_call.1} parent=5 // pred_check
        _
      $region30: #{tpu_custom_call.1} parent=5 // pred_check_branch
        %176 = sbr.rel (%p173) target = $region32
      $region31: #{tpu_custom_call.1} parent=5 // pred_region
        %s177 = ssub.s32 %s21, 1
        %s178 = sand.u32 %s34, 1
        %s179 = scalar_lea.sflag [#allocation5], %s178
        %s180 = sand.u32 %s34, 1
        %s181 = smul.addr %s180, 504
        %s182 = scalar_lea.vmem [#allocation4], %s181
        // Predicated region
        $region33: #{tpu_custom_call.1} parent=31 // pred_check
          %p183 = pneg %p47
        $region34: #{tpu_custom_call.1} parent=31 // pred_check_branch
          %185 = sbr.rel (%p183) target = $region36
        $region35: #{tpu_custom_call.1} parent=31 // pred_region
          %186 = dma.done %s179, 8064
        $region36: #{tpu_custom_call.1} parent=31 // pred_fallthru
          _
        // Predicated region
        $region37: #{tpu_custom_call.1} parent=31 // pred_check
          %p187 = pneg %p68
        $region38: #{tpu_custom_call.1} parent=31 // pred_check_branch
          %189 = sbr.rel (%p187) target = $region40
        $region39: #{tpu_custom_call.1} parent=31 // pred_region
          %190 = dma.done [#allocation8], 8192
        $region40: #{tpu_custom_call.1} parent=31 // pred_fallthru
          _
        %s191 = sand.u32 %s34, 1
        %s192 = scalar_lea.sflag [#allocation5], %s191
        %s193 = sand.u32 %s34, 1
        %s194 = smul.addr %s193, 504
        %s195 = scalar_lea.vmem [#allocation4], %s194
        %p196 = pneg %p47
        %p197 = pneg %p44
        %p198 = pneg %p68
        %p199 = pneg %p65
        %p200 = pneg %p89
        %p201 = pneg %p86
        %p202 = pneg %p115
        %p203 = pneg %p112
        %s204 = sand.u32 %s102, 1
        %s205 = scalar_lea.sflag [#allocation6], %s204
        %s206 = sand.u32 %s102, 1
        %s207 = smul.addr %s206, 252
        %s208 = scalar_lea.vmem [#allocation9], %s207
        %s209 = smul.u32 63, %s26
        %s210 = smul.u32 63, %s26
        %s212 = sld [smem:[#allocation3]]
        %v213 = vld [vmem:[#allocation7] sm:$0xff]
        %v214 = vld [vmem:[#allocation7 + $0x8] sm:$0xff]
        %v215 = vld [vmem:[#allocation7 + $0x10] sm:$0xff]
        %v216 = vld [vmem:[#allocation7 + $0x18] sm:$0xff]
        %v217 = vld [vmem:[#allocation7 + $0x20] sm:$0xff]
        %v218 = vld [vmem:[#allocation7 + $0x28] sm:$0xff]
        %v219 = vld [vmem:[#allocation7 + $0x30] sm:$0xff]
        %v220 = vld [vmem:[#allocation7 + $0x38] sm:$0xff]
        %v221 = vld [vmem:[#allocation7 + $0x40] sm:$0xff]
        %v222 = vld [vmem:[#allocation7 + $0x48] sm:$0xff]
        %v223 = vld [vmem:[#allocation7 + $0x50] sm:$0xff]
        %v224 = vld [vmem:[#allocation7 + $0x58] sm:$0xff]
        %v225 = vld [vmem:[#allocation7 + $0x60] sm:$0xff]
        %v226 = vld [vmem:[#allocation7 + $0x68] sm:$0xff]
        %v227 = vld [vmem:[#allocation7 + $0x70] sm:$0xff]
        %v228 = vld [vmem:[#allocation7 + $0x78] sm:$0xff]
        %v229 = vstv %s212
        %v230 = vmul.f32 %v229, %v213
        %v231 = vmul.f32 %v229, %v214
        %v232 = vmul.f32 %v229, %v215
        %v233 = vmul.f32 %v229, %v216
        %v234 = vmul.f32 %v229, %v217
        %v235 = vmul.f32 %v229, %v218
        %v236 = vmul.f32 %v229, %v219
        %v237 = vmul.f32 %v229, %v220
        %v238 = vmul.f32 %v229, %v221
        %v239 = vmul.f32 %v229, %v222
        %v240 = vmul.f32 %v229, %v223
        %v241 = vmul.f32 %v229, %v224
        %v242 = vmul.f32 %v229, %v225
        %v243 = vmul.f32 %v229, %v226
        %v244 = vmul.f32 %v229, %v227
        %v245 = vmul.f32 %v229, %v228
        %v246 = vld [vmem:[%s3] sm:$0x1]
        %v247 = vmul.f32 %v229, %v246
        %s248 = sld [smem:[#allocation3 + $0x1]]
        %s249 = scalar_lea.vmem [#allocation7], 128
        %v250 = vld [vmem:[%s249] sm:$0xff]
        %v251 = vld [vmem:[%s249 + $0x8] sm:$0xff]
        %v252 = vld [vmem:[%s249 + $0x10] sm:$0xff]
        %v253 = vld [vmem:[%s249 + $0x18] sm:$0xff]
        %v254 = vld [vmem:[%s249 + $0x20] sm:$0xff]
        %v255 = vld [vmem:[%s249 + $0x28] sm:$0xff]
        %v256 = vld [vmem:[%s249 + $0x30] sm:$0xff]
        %v257 = vld [vmem:[%s249 + $0x38] sm:$0xff]
        %v258 = vld [vmem:[%s249 + $0x40] sm:$0xff]
        %v259 = vld [vmem:[%s249 + $0x48] sm:$0xff]
        %v260 = vld [vmem:[%s249 + $0x50] sm:$0xff]
        %v261 = vld [vmem:[%s249 + $0x58] sm:$0xff]
        %v262 = vld [vmem:[%s249 + $0x60] sm:$0xff]
        %v263 = vld [vmem:[%s249 + $0x68] sm:$0xff]
        %v264 = vld [vmem:[%s249 + $0x70] sm:$0xff]
        %v265 = vld [vmem:[%s249 + $0x78] sm:$0xff]
        %v266 = vstv %s248
        %v267 = vmul.f32 %v266, %v250
        %v268 = vmul.f32 %v266, %v251
        %v269 = vmul.f32 %v266, %v252
        %v270 = vmul.f32 %v266, %v253
        %v271 = vmul.f32 %v266, %v254
        %v272 = vmul.f32 %v266, %v255
        %v273 = vmul.f32 %v266, %v256
        %v274 = vmul.f32 %v266, %v257
        %v275 = vmul.f32 %v266, %v258
        %v276 = vmul.f32 %v266, %v259
        %v277 = vmul.f32 %v266, %v260
        %v278 = vmul.f32 %v266, %v261
        %v279 = vmul.f32 %v266, %v262
        %v280 = vmul.f32 %v266, %v263
        %v281 = vmul.f32 %v266, %v264
        %v282 = vmul.f32 %v266, %v265
        %v283 = vadd.f32 %v230, %v267
        %v284 = vadd.f32 %v231, %v268
        %v285 = vadd.f32 %v232, %v269
        %v286 = vadd.f32 %v233, %v270
        %v287 = vadd.f32 %v234, %v271
        %v288 = vadd.f32 %v235, %v272
        %v289 = vadd.f32 %v236, %v273
        %v290 = vadd.f32 %v237, %v274
        %v291 = vadd.f32 %v238, %v275
        %v292 = vadd.f32 %v239, %v276
        %v293 = vadd.f32 %v240, %v277
        %v294 = vadd.f32 %v241, %v278
        %v295 = vadd.f32 %v242, %v279
        %v296 = vadd.f32 %v243, %v280
        %v297 = vadd.f32 %v244, %v281
        %v298 = vadd.f32 %v245, %v282
        %s299 = scalar_lea.vmem %s3, 1
        %v300 = vld [vmem:[%s299] sm:$0x1]
        %v301 = vmul.f32 %v266, %v300
        %v302 = vadd.f32 %v247, %v301
        %s303 = sld [smem:[#allocation3 + $0x2]]
        %s304 = scalar_lea.vmem [#allocation7], 256
        %v305 = vld [vmem:[%s304] sm:$0xff]
        %v306 = vld [vmem:[%s304 + $0x8] sm:$0xff]
        %v307 = vld [vmem:[%s304 + $0x10] sm:$0xff]
        %v308 = vld [vmem:[%s304 + $0x18] sm:$0xff]
        %v309 = vld [vmem:[%s304 + $0x20] sm:$0xff]
        %v310 = vld [vmem:[%s304 + $0x28] sm:$0xff]
        %v311 = vld [vmem:[%s304 + $0x30] sm:$0xff]
        %v312 = vld [vmem:[%s304 + $0x38] sm:$0xff]
        %v313 = vld [vmem:[%s304 + $0x40] sm:$0xff]
        %v314 = vld [vmem:[%s304 + $0x48] sm:$0xff]
        %v315 = vld [vmem:[%s304 + $0x50] sm:$0xff]
        %v316 = vld [vmem:[%s304 + $0x58] sm:$0xff]
        %v317 = vld [vmem:[%s304 + $0x60] sm:$0xff]
        %v318 = vld [vmem:[%s304 + $0x68] sm:$0xff]
        %v319 = vld [vmem:[%s304 + $0x70] sm:$0xff]
        %v320 = vld [vmem:[%s304 + $0x78] sm:$0xff]
        %v321 = vstv %s303
        %v322 = vmul.f32 %v321, %v305
        %v323 = vmul.f32 %v321, %v306
        %v324 = vmul.f32 %v321, %v307
        %v325 = vmul.f32 %v321, %v308
        %v326 = vmul.f32 %v321, %v309
        %v327 = vmul.f32 %v321, %v310
        %v328 = vmul.f32 %v321, %v311
        %v329 = vmul.f32 %v321, %v312
        %v330 = vmul.f32 %v321, %v313
        %v331 = vmul.f32 %v321, %v314
        %v332 = vmul.f32 %v321, %v315
        %v333 = vmul.f32 %v321, %v316
        %v334 = vmul.f32 %v321, %v317
        %v335 = vmul.f32 %v321, %v318
        %v336 = vmul.f32 %v321, %v319
        %v337 = vmul.f32 %v321, %v320
        %v338 = vadd.f32 %v283, %v322
        %v339 = vadd.f32 %v284, %v323
        %v340 = vadd.f32 %v285, %v324
        %v341 = vadd.f32 %v286, %v325
        %v342 = vadd.f32 %v287, %v326
        %v343 = vadd.f32 %v288, %v327
        %v344 = vadd.f32 %v289, %v328
        %v345 = vadd.f32 %v290, %v329
        %v346 = vadd.f32 %v291, %v330
        %v347 = vadd.f32 %v292, %v331
        %v348 = vadd.f32 %v293, %v332
        %v349 = vadd.f32 %v294, %v333
        %v350 = vadd.f32 %v295, %v334
        %v351 = vadd.f32 %v296, %v335
        %v352 = vadd.f32 %v297, %v336
        %v353 = vadd.f32 %v298, %v337
        %s354 = scalar_lea.vmem %s3, 2
        %v355 = vld [vmem:[%s354] sm:$0x1]
        %v356 = vmul.f32 %v321, %v355
        %v357 = vadd.f32 %v302, %v356
        %s358 = sld [smem:[#allocation3 + $0x3]]
        %s359 = scalar_lea.vmem [#allocation7], 384
        %v360 = vld [vmem:[%s359] sm:$0xff]
        %v361 = vld [vmem:[%s359 + $0x8] sm:$0xff]
        %v362 = vld [vmem:[%s359 + $0x10] sm:$0xff]
        %v363 = vld [vmem:[%s359 + $0x18] sm:$0xff]
        %v364 = vld [vmem:[%s359 + $0x20] sm:$0xff]
        %v365 = vld [vmem:[%s359 + $0x28] sm:$0xff]
        %v366 = vld [vmem:[%s359 + $0x30] sm:$0xff]
        %v367 = vld [vmem:[%s359 + $0x38] sm:$0xff]
        %v368 = vld [vmem:[%s359 + $0x40] sm:$0xff]
        %v369 = vld [vmem:[%s359 + $0x48] sm:$0xff]
        %v370 = vld [vmem:[%s359 + $0x50] sm:$0xff]
        %v371 = vld [vmem:[%s359 + $0x58] sm:$0xff]
        %v372 = vld [vmem:[%s359 + $0x60] sm:$0xff]
        %v373 = vld [vmem:[%s359 + $0x68] sm:$0xff]
        %v374 = vld [vmem:[%s359 + $0x70] sm:$0xff]
        %v375 = vld [vmem:[%s359 + $0x78] sm:$0xff]
        %v376 = vstv %s358
        %v377 = vmul.f32 %v376, %v360
        %v378 = vmul.f32 %v376, %v361
        %v379 = vmul.f32 %v376, %v362
        %v380 = vmul.f32 %v376, %v363
        %v381 = vmul.f32 %v376, %v364
        %v382 = vmul.f32 %v376, %v365
        %v383 = vmul.f32 %v376, %v366
        %v384 = vmul.f32 %v376, %v367
        %v385 = vmul.f32 %v376, %v368
        %v386 = vmul.f32 %v376, %v369
        %v387 = vmul.f32 %v376, %v370
        %v388 = vmul.f32 %v376, %v371
        %v389 = vmul.f32 %v376, %v372
        %v390 = vmul.f32 %v376, %v373
        %v391 = vmul.f32 %v376, %v374
        %v392 = vmul.f32 %v376, %v375
        %v393 = vadd.f32 %v338, %v377
        %v394 = vadd.f32 %v339, %v378
        %v395 = vadd.f32 %v340, %v379
        %v396 = vadd.f32 %v341, %v380
        %v397 = vadd.f32 %v342, %v381
        %v398 = vadd.f32 %v343, %v382
        %v399 = vadd.f32 %v344, %v383
        %v400 = vadd.f32 %v345, %v384
        %v401 = vadd.f32 %v346, %v385
        %v402 = vadd.f32 %v347, %v386
        %v403 = vadd.f32 %v348, %v387
        %v404 = vadd.f32 %v349, %v388
        %v405 = vadd.f32 %v350, %v389
        %v406 = vadd.f32 %v351, %v390
        %v407 = vadd.f32 %v352, %v391
        %v408 = vadd.f32 %v353, %v392
        %s409 = scalar_lea.vmem %s3, 3
        %v410 = vld [vmem:[%s409] sm:$0x1]
        %v411 = vmul.f32 %v376, %v410
        %v412 = vadd.f32 %v357, %v411
        %v413 = vld [vmem:[%s182] sm:$0xff]
        %v414 = vld [vmem:[%s182 + $0x8] sm:$0xff]
        %v415 = vld [vmem:[%s182 + $0x10] sm:$0xff]
        %v416 = vld [vmem:[%s182 + $0x18] sm:$0xff]
        %v417 = vld [vmem:[%s182 + $0x20] sm:$0xff]
        %v418 = vld [vmem:[%s182 + $0x28] sm:$0xff]
        %v419 = vld [vmem:[%s182 + $0x30] sm:$0xff]
        %v420 = vld [vmem:[%s182 + $0x38] sm:$0xff]
        %v421 = vld [vmem:[%s182 + $0x40] sm:$0xff]
        %v422 = vld [vmem:[%s182 + $0x48] sm:$0xff]
        %v423 = vld [vmem:[%s182 + $0x50] sm:$0xff]
        %v424 = vld [vmem:[%s182 + $0x58] sm:$0xff]
        %v425 = vld [vmem:[%s182 + $0x60] sm:$0xff]
        %v426 = vld [vmem:[%s182 + $0x68] sm:$0xff]
        %v427 = vld [vmem:[%s182 + $0x70] sm:$0xff]
        %v428 = vld [vmem:[%s182 + $0x78] sm:$0xff]
        %v429 = vld [vmem:[%s182 + $0x80] sm:$0xff]
        %v430 = vld [vmem:[%s182 + $0x88] sm:$0xff]
        %v431 = vld [vmem:[%s182 + $0x90] sm:$0xff]
        %v432 = vld [vmem:[%s182 + $0x98] sm:$0xff]
        %v433 = vld [vmem:[%s182 + $0xa0] sm:$0xff]
        %v434 = vld [vmem:[%s182 + $0xa8] sm:$0xff]
        %v435 = vld [vmem:[%s182 + $0xb0] sm:$0xff]
        %v436 = vld [vmem:[%s182 + $0xb8] sm:$0xff]
        %v437 = vld [vmem:[%s182 + $0xc0] sm:$0xff]
        %v438 = vld [vmem:[%s182 + $0xc8] sm:$0xff]
        %v439 = vld [vmem:[%s182 + $0xd0] sm:$0xff]
        %v440 = vld [vmem:[%s182 + $0xd8] sm:$0xff]
        %v441 = vld [vmem:[%s182 + $0xe0] sm:$0xff]
        %v442 = vld [vmem:[%s182 + $0xe8] sm:$0xff]
        %v443 = vld [vmem:[%s182 + $0xf0] sm:$0xff]
        %v444 = vld [vmem:[%s182 + $0xf8] sm:$0xff]
        %v445 = vld [vmem:[%s182 + $0x100] sm:$0xff]
        %v446 = vld [vmem:[%s182 + $0x108] sm:$0xff]
        %v447 = vld [vmem:[%s182 + $0x110] sm:$0xff]
        %v448 = vld [vmem:[%s182 + $0x118] sm:$0xff]
        %v449 = vld [vmem:[%s182 + $0x120] sm:$0xff]
        %v450 = vld [vmem:[%s182 + $0x128] sm:$0xff]
        %v451 = vld [vmem:[%s182 + $0x130] sm:$0xff]
        %v452 = vld [vmem:[%s182 + $0x138] sm:$0xff]
        %v453 = vld [vmem:[%s182 + $0x140] sm:$0xff]
        %v454 = vld [vmem:[%s182 + $0x148] sm:$0xff]
        %v455 = vld [vmem:[%s182 + $0x150] sm:$0xff]
        %v456 = vld [vmem:[%s182 + $0x158] sm:$0xff]
        %v457 = vld [vmem:[%s182 + $0x160] sm:$0xff]
        %v458 = vld [vmem:[%s182 + $0x168] sm:$0xff]
        %v459 = vld [vmem:[%s182 + $0x170] sm:$0xff]
        %v460 = vld [vmem:[%s182 + $0x178] sm:$0xff]
        %v461 = vld [vmem:[%s182 + $0x180] sm:$0xff]
        %v462 = vld [vmem:[%s182 + $0x188] sm:$0xff]
        %v463 = vld [vmem:[%s182 + $0x190] sm:$0xff]
        %v464 = vld [vmem:[%s182 + $0x198] sm:$0xff]
        %v465 = vld [vmem:[%s182 + $0x1a0] sm:$0xff]
        %v466 = vld [vmem:[%s182 + $0x1a8] sm:$0xff]
        %v467 = vld [vmem:[%s182 + $0x1b0] sm:$0xff]
        %v468 = vld [vmem:[%s182 + $0x1b8] sm:$0xff]
        %v469 = vld [vmem:[%s182 + $0x1c0] sm:$0xff]
        %v470 = vld [vmem:[%s182 + $0x1c8] sm:$0xff]
        %v471 = vld [vmem:[%s182 + $0x1d0] sm:$0xff]
        %v472 = vld [vmem:[%s182 + $0x1d8] sm:$0xff]
        %v473 = vld [vmem:[%s182 + $0x1e0] sm:$0xff]
        %v474 = vld [vmem:[%s182 + $0x1e8] sm:$0xff]
        %v475 = vld [vmem:[%s182 + $0x1f0] sm:$0xff]
        %v476 = vpack.c.bf16 %v414, %v413
        %v477 = vpack.c.bf16 %v416, %v415
        %v478 = vpack.c.bf16 %v418, %v417
        %v479 = vpack.c.bf16 %v420, %v419
        %v480 = vpack.c.bf16 %v422, %v421
        %v481 = vpack.c.bf16 %v424, %v423
        %v482 = vpack.c.bf16 %v426, %v425
        %v483 = vpack.c.bf16 %v428, %v427
        %v484 = vpack.c.bf16 %v430, %v429
        %v485 = vpack.c.bf16 %v432, %v431
        %v486 = vpack.c.bf16 %v434, %v433
        %v487 = vpack.c.bf16 %v436, %v435
        %v488 = vpack.c.bf16 %v438, %v437
        %v489 = vpack.c.bf16 %v440, %v439
        %v490 = vpack.c.bf16 %v442, %v441
        %v491 = vpack.c.bf16 %v444, %v443
        %v492 = vpack.c.bf16 %v446, %v445
        %v493 = vpack.c.bf16 %v448, %v447
        %v494 = vpack.c.bf16 %v450, %v449
        %v495 = vpack.c.bf16 %v452, %v451
        %v496 = vpack.c.bf16 %v454, %v453
        %v497 = vpack.c.bf16 %v456, %v455
        %v498 = vpack.c.bf16 %v458, %v457
        %v499 = vpack.c.bf16 %v460, %v459
        %v500 = vpack.c.bf16 %v462, %v461
        %v501 = vpack.c.bf16 %v464, %v463
        %v502 = vpack.c.bf16 %v466, %v465
        %v503 = vpack.c.bf16 %v468, %v467
        %v504 = vpack.c.bf16 %v470, %v469
        %v505 = vpack.c.bf16 %v472, %v471
        %v506 = vpack.c.bf16 %v474, %v473
        %v507 = vpack.c.bf16 %v475, %v475
        %v508 = vpack.c.bf16 %v394, %v393
        %v509 = vpack.c.bf16 %v396, %v395
        %v510 = vpack.c.bf16 %v398, %v397
        %v511 = vpack.c.bf16 %v400, %v399
        %v512 = vpack.c.bf16 %v402, %v401
        %v513 = vpack.c.bf16 %v404, %v403
        %v514 = vpack.c.bf16 %v406, %v405
        %v515 = vpack.c.bf16 %v408, %v407
        %v517 = vlaneseq
        %v518 = vshrl.u32 %v517, 7
        %v519 = vsub.s32 0, %v518
        %v520 = vrot.slane %v412, %v519
        %522 = vmatprep.subr.bf16.mxu0 0
        %523 = vmatpush1.bf16.msra.mxu0 %v508
        %524 = vmatprep.subr.bf16.mxu0 0
        %525 = vmatpush1.bf16.msra.mxu0 %v509
        %526 = vmatprep.subr.bf16.mxu0 0
        %527 = vmatpush1.bf16.msra.mxu0 %v510
        %528 = vmatprep.subr.bf16.mxu0 0
        %529 = vmatpush1.bf16.msra.mxu0 %v511
        %530 = vmatprep.subr.bf16.mxu0 0
        %531 = vmatpush1.bf16.msra.mxu0 %v512
        %532 = vmatprep.subr.bf16.mxu0 0
        %533 = vmatpush1.bf16.msra.mxu0 %v513
        %534 = vmatprep.subr.bf16.mxu0 0
        %535 = vmatpush1.bf16.msra.mxu0 %v514
        %536 = vmatprep.subr.bf16.mxu0 0
        %537 = vmatpush1.bf16.msra.mxu0 %v515
        %538 = vmatprep.subr.bf16.mxu0 0
        %539 = vmatpush1.bf16.msra.mxu0 0
        %540 = vmatprep.subr.bf16.mxu0 0
        %541 = vmatpush1.bf16.msra.mxu0 0
        %542 = vmatprep.subr.bf16.mxu0 0
        %543 = vmatpush1.bf16.msra.mxu0 0
        %544 = vmatprep.subr.bf16.mxu0 0
        %545 = vmatpush1.bf16.msra.mxu0 0
        %546 = vmatprep.subr.bf16.mxu0 0
        %547 = vmatpush1.bf16.msra.mxu0 0
        %548 = vmatprep.subr.bf16.mxu0 0
        %549 = vmatpush1.bf16.msra.mxu0 0
        %550 = vmatprep.subr.bf16.mxu0 0
        %551 = vmatpush1.bf16.msra.mxu0 0
        %552 = vmatprep.subr.bf16.mxu0 0
        %553 = vmatpush1.bf16.msra.mxu0 0
        %554 = vmatprep.mubr.bf16.mxu0 0
        %555 = vmatmul.mubr.bf16.gmra.mrb[0].mxu0 %v476
        %v556 = vpop.f32.mrb[0].mxu0
        %v557 = vadd.f32 %v520, %v556
        %v558 = vpop.f32.mrb[0].mxu0
        %v559 = vpop.f32.mrb[0].mxu0
        %v560 = vadd.f32 %v520, %v559
        %v561 = vpop.f32.mrb[0].mxu0
        %562 = vmatprep.mubr.bf16.mxu0 0
        %563 = vmatmul.mubr.bf16.gmra.mrb[0].mxu0 %v477
        %v564 = vpop.f32.mrb[0].mxu0
        %v565 = vadd.f32 %v520, %v564
        %v566 = vpop.f32.mrb[0].mxu0
        %v567 = vpop.f32.mrb[0].mxu0
        %v568 = vadd.f32 %v520, %v567
        %v569 = vpop.f32.mrb[0].mxu0
        %570 = vmatprep.mubr.bf16.mxu0 0
        %571 = vmatmul.mubr.bf16.gmra.mrb[0].mxu0 %v478
        %v572 = vpop.f32.mrb[0].mxu0
        %v573 = vadd.f32 %v520, %v572
        %v574 = vpop.f32.mrb[0].mxu0
        %v575 = vpop.f32.mrb[0].mxu0
        %v576 = vadd.f32 %v520, %v575
        %v577 = vpop.f32.mrb[0].mxu0
        %578 = vmatprep.mubr.bf16.mxu0 0
        %579 = vmatmul.mubr.bf16.gmra.mrb[0].mxu0 %v479
        %v580 = vpop.f32.mrb[0].mxu0
        %v581 = vadd.f32 %v520, %v580
        %v582 = vpop.f32.mrb[0].mxu0
        %v583 = vpop.f32.mrb[0].mxu0
        %v584 = vadd.f32 %v520, %v583
        %v585 = vpop.f32.mrb[0].mxu0
        %586 = vmatprep.mubr.bf16.mxu0 0
        %587 = vmatmul.mubr.bf16.gmra.mrb[0].mxu0 %v480
        %v588 = vpop.f32.mrb[0].mxu0
        %v589 = vadd.f32 %v520, %v588
        %v590 = vpop.f32.mrb[0].mxu0
        %v591 = vpop.f32.mrb[0].mxu0
        %v592 = vadd.f32 %v520, %v591
        %v593 = vpop.f32.mrb[0].mxu0
        %594 = vmatprep.mubr.bf16.mxu0 0
        %595 = vmatmul.mubr.bf16.gmra.mrb[0].mxu0 %v481
        %v596 = vpop.f32.mrb[0].mxu0
        %v597 = vadd.f32 %v520, %v596
        %v598 = vpop.f32.mrb[0].mxu0
        %v599 = vpop.f32.mrb[0].mxu0
        %v600 = vadd.f32 %v520, %v599
        %v601 = vpop.f32.mrb[0].mxu0
        %602 = vmatprep.mubr.bf16.mxu0 0
        %603 = vmatmul.mubr.bf16.gmra.mrb[0].mxu0 %v482
        %v604 = vpop.f32.mrb[0].mxu0
        %v605 = vadd.f32 %v520, %v604
        %v606 = vpop.f32.mrb[0].mxu0
        %v607 = vpop.f32.mrb[0].mxu0
        %v608 = vadd.f32 %v520, %v607
        %v609 = vpop.f32.mrb[0].mxu0
        %610 = vmatprep.mubr.bf16.mxu0 0
        %611 = vmatmul.mubr.bf16.gmra.mrb[0].mxu0 %v483
        %v612 = vpop.f32.mrb[0].mxu0
        %v613 = vadd.f32 %v520, %v612
        %v614 = vpop.f32.mrb[0].mxu0
        %v615 = vpop.f32.mrb[0].mxu0
        %v616 = vadd.f32 %v520, %v615
        %v617 = vpop.f32.mrb[0].mxu0
        %618 = vmatprep.mubr.bf16.mxu0 0
        %619 = vmatmul.mubr.bf16.gmra.mrb[0].mxu0 %v484
        %v620 = vpop.f32.mrb[0].mxu0
        %v621 = vadd.f32 %v520, %v620
        %v622 = vpop.f32.mrb[0].mxu0
        %v623 = vpop.f32.mrb[0].mxu0
        %v624 = vadd.f32 %v520, %v623
        %v625 = vpop.f32.mrb[0].mxu0
        %626 = vmatprep.mubr.bf16.mxu0 0
        %627 = vmatmul.mubr.bf16.gmra.mrb[0].mxu0 %v485
        %v628 = vpop.f32.mrb[0].mxu0
        %v629 = vadd.f32 %v520, %v628
        %v630 = vpop.f32.mrb[0].mxu0
        %v631 = vpop.f32.mrb[0].mxu0
        %v632 = vadd.f32 %v520, %v631
        %v633 = vpop.f32.mrb[0].mxu0
        %634 = vmatprep.mubr.bf16.mxu0 0
        %635 = vmatmul.mubr.bf16.gmra.mrb[0].mxu0 %v486
        %v636 = vpop.f32.mrb[0].mxu0
        %v637 = vadd.f32 %v520, %v636
        %v638 = vpop.f32.mrb[0].mxu0
        %v639 = vpop.f32.mrb[0].mxu0
        %v640 = vadd.f32 %v520, %v639
        %v641 = vpop.f32.mrb[0].mxu0
        %642 = vmatprep.mubr.bf16.mxu0 0
        %643 = vmatmul.mubr.bf16.gmra.mrb[0].mxu0 %v487
        %v644 = vpop.f32.mrb[0].mxu0
        %v645 = vadd.f32 %v520, %v644
        %v646 = vpop.f32.mrb[0].mxu0
        %v647 = vpop.f32.mrb[0].mxu0
        %v648 = vadd.f32 %v520, %v647
        %v649 = vpop.f32.mrb[0].mxu0
        %650 = vmatprep.mubr.bf16.mxu0 0
        %651 = vmatmul.mubr.bf16.gmra.mrb[0].mxu0 %v488
        %v652 = vpop.f32.mrb[0].mxu0
        %v653 = vadd.f32 %v520, %v652
        %v654 = vpop.f32.mrb[0].mxu0
        %v655 = vpop.f32.mrb[0].mxu0
        %v656 = vadd.f32 %v520, %v655
        %v657 = vpop.f32.mrb[0].mxu0
        %658 = vmatprep.mubr.bf16.mxu0 0
        %659 = vmatmul.mubr.bf16.gmra.mrb[0].mxu0 %v489
        %v660 = vpop.f32.mrb[0].mxu0
        %v661 = vadd.f32 %v520, %v660
        %v662 = vpop.f32.mrb[0].mxu0
        %v663 = vpop.f32.mrb[0].mxu0
        %v664 = vadd.f32 %v520, %v663
        %v665 = vpop.f32.mrb[0].mxu0
        %666 = vmatprep.mubr.bf16.mxu0 0
        %667 = vmatmul.mubr.bf16.gmra.mrb[0].mxu0 %v490
        %v668 = vpop.f32.mrb[0].mxu0
        %v669 = vadd.f32 %v520, %v668
        %v670 = vpop.f32.mrb[0].mxu0
        %v671 = vpop.f32.mrb[0].mxu0
        %v672 = vadd.f32 %v520, %v671
        %v673 = vpop.f32.mrb[0].mxu0
        %674 = vmatprep.mubr.bf16.mxu0 0
        %675 = vmatmul.mubr.bf16.gmra.mrb[0].mxu0 %v491
        %v676 = vpop.f32.mrb[0].mxu0
        %v677 = vadd.f32 %v520, %v676
        %v678 = vpop.f32.mrb[0].mxu0
        %v679 = vpop.f32.mrb[0].mxu0
        %v680 = vadd.f32 %v520, %v679
        %v681 = vpop.f32.mrb[0].mxu0
        %682 = vmatprep.mubr.bf16.mxu0 0
        %683 = vmatmul.mubr.bf16.gmra.mrb[0].mxu0 %v492
        %v684 = vpop.f32.mrb[0].mxu0
        %v685 = vadd.f32 %v520, %v684
        %v686 = vpop.f32.mrb[0].mxu0
        %v687 = vpop.f32.mrb[0].mxu0
        %v688 = vadd.f32 %v520, %v687
        %v689 = vpop.f32.mrb[0].mxu0
        %690 = vmatprep.mubr.bf16.mxu0 0
        %691 = vmatmul.mubr.bf16.gmra.mrb[0].mxu0 %v493
        %v692 = vpop.f32.mrb[0].mxu0
        %v693 = vadd.f32 %v520, %v692
        %v694 = vpop.f32.mrb[0].mxu0
        %v695 = vpop.f32.mrb[0].mxu0
        %v696 = vadd.f32 %v520, %v695
        %v697 = vpop.f32.mrb[0].mxu0
        %698 = vmatprep.mubr.bf16.mxu0 0
        %699 = vmatmul.mubr.bf16.gmra.mrb[0].mxu0 %v494
        %v700 = vpop.f32.mrb[0].mxu0
        %v701 = vadd.f32 %v520, %v700
        %v702 = vpop.f32.mrb[0].mxu0
        %v703 = vpop.f32.mrb[0].mxu0
        %v704 = vadd.f32 %v520, %v703
        %v705 = vpop.f32.mrb[0].mxu0
        %706 = vmatprep.mubr.bf16.mxu0 0
        %707 = vmatmul.mubr.bf16.gmra.mrb[0].mxu0 %v495
        %v708 = vpop.f32.mrb[0].mxu0
        %v709 = vadd.f32 %v520, %v708
        %v710 = vpop.f32.mrb[0].mxu0
        %v711 = vpop.f32.mrb[0].mxu0
        %v712 = vadd.f32 %v520, %v711
        %v713 = vpop.f32.mrb[0].mxu0
        %714 = vmatprep.mubr.bf16.mxu0 0
        %715 = vmatmul.mubr.bf16.gmra.mrb[0].mxu0 %v496
        %v716 = vpop.f32.mrb[0].mxu0
        %v717 = vadd.f32 %v520, %v716
        %v718 = vpop.f32.mrb[0].mxu0
        %v719 = vpop.f32.mrb[0].mxu0
        %v720 = vadd.f32 %v520, %v719
        %v721 = vpop.f32.mrb[0].mxu0
        %722 = vmatprep.mubr.bf16.mxu0 0
        %723 = vmatmul.mubr.bf16.gmra.mrb[0].mxu0 %v497
        %v724 = vpop.f32.mrb[0].mxu0
        %v725 = vadd.f32 %v520, %v724
        %v726 = vpop.f32.mrb[0].mxu0
        %v727 = vpop.f32.mrb[0].mxu0
        %v728 = vadd.f32 %v520, %v727
        %v729 = vpop.f32.mrb[0].mxu0
        %730 = vmatprep.mubr.bf16.mxu0 0
        %731 = vmatmul.mubr.bf16.gmra.mrb[0].mxu0 %v498
        %v732 = vpop.f32.mrb[0].mxu0
        %v733 = vadd.f32 %v520, %v732
        %v734 = vpop.f32.mrb[0].mxu0
        %v735 = vpop.f32.mrb[0].mxu0
        %v736 = vadd.f32 %v520, %v735
        %v737 = vpop.f32.mrb[0].mxu0
        %738 = vmatprep.mubr.bf16.mxu0 0
        %739 = vmatmul.mubr.bf16.gmra.mrb[0].mxu0 %v499
        %v740 = vpop.f32.mrb[0].mxu0
        %v741 = vadd.f32 %v520, %v740
        %v742 = vpop.f32.mrb[0].mxu0
        %v743 = vpop.f32.mrb[0].mxu0
        %v744 = vadd.f32 %v520, %v743
        %v745 = vpop.f32.mrb[0].mxu0
        %746 = vmatprep.mubr.bf16.mxu0 0
        %747 = vmatmul.mubr.bf16.gmra.mrb[0].mxu0 %v500
        %v748 = vpop.f32.mrb[0].mxu0
        %v749 = vadd.f32 %v520, %v748
        %v750 = vpop.f32.mrb[0].mxu0
        %v751 = vpop.f32.mrb[0].mxu0
        %v752 = vadd.f32 %v520, %v751
        %v753 = vpop.f32.mrb[0].mxu0
        %754 = vmatprep.mubr.bf16.mxu0 0
        %755 = vmatmul.mubr.bf16.gmra.mrb[0].mxu0 %v501
        %v756 = vpop.f32.mrb[0].mxu0
        %v757 = vadd.f32 %v520, %v756
        %v758 = vpop.f32.mrb[0].mxu0
        %v759 = vpop.f32.mrb[0].mxu0
        %v760 = vadd.f32 %v520, %v759
        %v761 = vpop.f32.mrb[0].mxu0
        %762 = vmatprep.mubr.bf16.mxu0 0
        %763 = vmatmul.mubr.bf16.gmra.mrb[0].mxu0 %v502
        %v764 = vpop.f32.mrb[0].mxu0
        %v765 = vadd.f32 %v520, %v764
        %v766 = vpop.f32.mrb[0].mxu0
        %v767 = vpop.f32.mrb[0].mxu0
        %v768 = vadd.f32 %v520, %v767
        %v769 = vpop.f32.mrb[0].mxu0
        %770 = vmatprep.mubr.bf16.mxu0 0
        %771 = vmatmul.mubr.bf16.gmra.mrb[0].mxu0 %v503
        %v772 = vpop.f32.mrb[0].mxu0
        %v773 = vadd.f32 %v520, %v772
        %v774 = vpop.f32.mrb[0].mxu0
        %v775 = vpop.f32.mrb[0].mxu0
        %v776 = vadd.f32 %v520, %v775
        %v777 = vpop.f32.mrb[0].mxu0
        %778 = vmatprep.mubr.bf16.mxu0 0
        %779 = vmatmul.mubr.bf16.gmra.mrb[0].mxu0 %v504
        %v780 = vpop.f32.mrb[0].mxu0
        %v781 = vadd.f32 %v520, %v780
        %v782 = vpop.f32.mrb[0].mxu0
        %v783 = vpop.f32.mrb[0].mxu0
        %v784 = vadd.f32 %v520, %v783
        %v785 = vpop.f32.mrb[0].mxu0
        %786 = vmatprep.mubr.bf16.mxu0 0
        %787 = vmatmul.mubr.bf16.gmra.mrb[0].mxu0 %v505
        %v788 = vpop.f32.mrb[0].mxu0
        %v789 = vadd.f32 %v520, %v788
        %v790 = vpop.f32.mrb[0].mxu0
        %v791 = vpop.f32.mrb[0].mxu0
        %v792 = vadd.f32 %v520, %v791
        %v793 = vpop.f32.mrb[0].mxu0
        %794 = vmatprep.mubr.bf16.mxu0 0
        %795 = vmatmul.mubr.bf16.gmra.mrb[0].mxu0 %v506
        %v796 = vpop.f32.mrb[0].mxu0
        %v797 = vadd.f32 %v520, %v796
        %v798 = vpop.f32.mrb[0].mxu0
        %v799 = vpop.f32.mrb[0].mxu0
        %v800 = vadd.f32 %v520, %v799
        %v801 = vpop.f32.mrb[0].mxu0
        %802 = vmatprep.mubr.bf16.mxu0 0
        %803 = vmatmul.mubr.bf16.gmra.mrb[0].mxu0 %v507
        %v804 = vpop.f32.mrb[0].mxu0
        %v805 = vadd.f32 %v520, %v804
        %v806 = vpop.f32.mrb[0].mxu0
        %v807 = vpop.f32.mrb[0].mxu0
        %v808 = vpop.f32.mrb[0].mxu0
        %809 = vdwg.mxu0
        %v810 = vpack.c.bf16 %v560, %v557
        %v811 = vpack.c.bf16 %v568, %v565
        %v812 = vpack.c.bf16 %v576, %v573
        %v813 = vpack.c.bf16 %v584, %v581
        %v814 = vpack.c.bf16 %v592, %v589
        %v815 = vpack.c.bf16 %v600, %v597
        %v816 = vpack.c.bf16 %v608, %v605
        %v817 = vpack.c.bf16 %v616, %v613
        %v818 = vpack.c.bf16 %v624, %v621
        %v819 = vpack.c.bf16 %v632, %v629
        %v820 = vpack.c.bf16 %v640, %v637
        %v821 = vpack.c.bf16 %v648, %v645
        %v822 = vpack.c.bf16 %v656, %v653
        %v823 = vpack.c.bf16 %v664, %v661
        %v824 = vpack.c.bf16 %v672, %v669
        %v825 = vpack.c.bf16 %v680, %v677
        %v826 = vpack.c.bf16 %v688, %v685
        %v827 = vpack.c.bf16 %v696, %v693
        %v828 = vpack.c.bf16 %v704, %v701
        %v829 = vpack.c.bf16 %v712, %v709
        %v830 = vpack.c.bf16 %v720, %v717
        %v831 = vpack.c.bf16 %v728, %v725
        %v832 = vpack.c.bf16 %v736, %v733
        %v833 = vpack.c.bf16 %v744, %v741
        %v834 = vpack.c.bf16 %v752, %v749
        %v835 = vpack.c.bf16 %v760, %v757
        %v836 = vpack.c.bf16 %v768, %v765
        %v837 = vpack.c.bf16 %v776, %v773
        %v838 = vpack.c.bf16 %v784, %v781
        %v839 = vpack.c.bf16 %v792, %v789
        %v840 = vpack.c.bf16 %v800, %v797
        %v841 = vpack.c.bf16 %v805, %v805
        %v874 = vunpack.c.l.b16 %v810
        %v875 = vunpack.c.h.b16 %v810
        %v876 = vunpack.c.l.b16 %v811
        %v877 = vunpack.c.h.b16 %v811
        %v878 = vunpack.c.l.b16 %v812
        %v879 = vunpack.c.h.b16 %v812
        %v880 = vunpack.c.l.b16 %v813
        %v881 = vunpack.c.h.b16 %v813
        %v882 = vunpack.c.l.b16 %v814
        %v883 = vunpack.c.h.b16 %v814
        %v884 = vunpack.c.l.b16 %v815
        %v885 = vunpack.c.h.b16 %v815
        %v886 = vunpack.c.l.b16 %v816
        %v887 = vunpack.c.h.b16 %v816
        %v888 = vunpack.c.l.b16 %v817
        %v889 = vunpack.c.h.b16 %v817
        %v890 = vunpack.c.l.b16 %v818
        %v891 = vunpack.c.h.b16 %v818
        %v892 = vunpack.c.l.b16 %v819
        %v893 = vunpack.c.h.b16 %v819
        %v894 = vunpack.c.l.b16 %v820
        %v895 = vunpack.c.h.b16 %v820
        %v896 = vunpack.c.l.b16 %v821
        %v897 = vunpack.c.h.b16 %v821
        %v898 = vunpack.c.l.b16 %v822
        %v899 = vunpack.c.h.b16 %v822
        %v900 = vunpack.c.l.b16 %v823
        %v901 = vunpack.c.h.b16 %v823
        %v902 = vunpack.c.l.b16 %v824
        %v903 = vunpack.c.h.b16 %v824
        %v904 = vunpack.c.l.b16 %v825
        %v905 = vunpack.c.h.b16 %v825
        %v906 = vunpack.c.l.b16 %v826
        %v907 = vunpack.c.h.b16 %v826
        %v908 = vunpack.c.l.b16 %v827
        %v909 = vunpack.c.h.b16 %v827
        %v910 = vunpack.c.l.b16 %v828
        %v911 = vunpack.c.h.b16 %v828
        %v912 = vunpack.c.l.b16 %v829
        %v913 = vunpack.c.h.b16 %v829
        %v914 = vunpack.c.l.b16 %v830
        %v915 = vunpack.c.h.b16 %v830
        %v916 = vunpack.c.l.b16 %v831
        %v917 = vunpack.c.h.b16 %v831
        %v918 = vunpack.c.l.b16 %v832
        %v919 = vunpack.c.h.b16 %v832
        %v920 = vunpack.c.l.b16 %v833
        %v921 = vunpack.c.h.b16 %v833
        %v922 = vunpack.c.l.b16 %v834
        %v923 = vunpack.c.h.b16 %v834
        %v924 = vunpack.c.l.b16 %v835
        %v925 = vunpack.c.h.b16 %v835
        %v926 = vunpack.c.l.b16 %v836
        %v927 = vunpack.c.h.b16 %v836
        %v928 = vunpack.c.l.b16 %v837
        %v929 = vunpack.c.h.b16 %v837
        %v930 = vunpack.c.l.b16 %v838
        %v931 = vunpack.c.h.b16 %v838
        %v932 = vunpack.c.l.b16 %v839
        %v933 = vunpack.c.h.b16 %v839
        %v934 = vunpack.c.l.b16 %v840
        %v935 = vunpack.c.h.b16 %v840
        %v936 = vunpack.c.l.b16 %v841
        %v937 = vpack.c.b16 %v874, %v874
        %v938 = vpack.c.b16 %v875, %v875
        %v939 = vpack.c.b16 %v876, %v876
        %v940 = vpack.c.b16 %v877, %v877
        %v941 = vpack.c.b16 %v878, %v878
        %v942 = vpack.c.b16 %v879, %v879
        %v943 = vpack.c.b16 %v880, %v880
        %v944 = vpack.c.b16 %v881, %v881
        %v945 = vpack.c.b16 %v882, %v882
        %v946 = vpack.c.b16 %v883, %v883
        %v947 = vpack.c.b16 %v884, %v884
        %v948 = vpack.c.b16 %v885, %v885
        %v949 = vpack.c.b16 %v886, %v886
        %v950 = vpack.c.b16 %v887, %v887
        %v951 = vpack.c.b16 %v888, %v888
        %v952 = vpack.c.b16 %v889, %v889
        %v953 = vpack.c.b16 %v890, %v890
        %v954 = vpack.c.b16 %v891, %v891
        %v955 = vpack.c.b16 %v892, %v892
        %v956 = vpack.c.b16 %v893, %v893
        %v957 = vpack.c.b16 %v894, %v894
        %v958 = vpack.c.b16 %v895, %v895
        %v959 = vpack.c.b16 %v896, %v896
        %v960 = vpack.c.b16 %v897, %v897
        %v961 = vpack.c.b16 %v898, %v898
        %v962 = vpack.c.b16 %v899, %v899
        %v963 = vpack.c.b16 %v900, %v900
        %v964 = vpack.c.b16 %v901, %v901
        %v965 = vpack.c.b16 %v902, %v902
        %v966 = vpack.c.b16 %v903, %v903
        %v967 = vpack.c.b16 %v904, %v904
        %v968 = vpack.c.b16 %v905, %v905
        %v969 = vpack.c.b16 %v906, %v906
        %v970 = vpack.c.b16 %v907, %v907
        %v971 = vpack.c.b16 %v908, %v908
        %v972 = vpack.c.b16 %v909, %v909
        %v973 = vpack.c.b16 %v910, %v910
        %v974 = vpack.c.b16 %v911, %v911
        %v975 = vpack.c.b16 %v912, %v912
        %v976 = vpack.c.b16 %v913, %v913
        %v977 = vpack.c.b16 %v914, %v914
        %v978 = vpack.c.b16 %v915, %v915
        %v979 = vpack.c.b16 %v916, %v916
        %v980 = vpack.c.b16 %v917, %v917
        %v981 = vpack.c.b16 %v918, %v918
        %v982 = vpack.c.b16 %v919, %v919
        %v983 = vpack.c.b16 %v920, %v920
        %v984 = vpack.c.b16 %v921, %v921
        %v985 = vpack.c.b16 %v922, %v922
        %v986 = vpack.c.b16 %v923, %v923
        %v987 = vpack.c.b16 %v924, %v924
        %v988 = vpack.c.b16 %v925, %v925
        %v989 = vpack.c.b16 %v926, %v926
        %v990 = vpack.c.b16 %v927, %v927
        %v991 = vpack.c.b16 %v928, %v928
        %v992 = vpack.c.b16 %v929, %v929
        %v993 = vpack.c.b16 %v930, %v930
        %v994 = vpack.c.b16 %v931, %v931
        %v995 = vpack.c.b16 %v932, %v932
        %v996 = vpack.c.b16 %v933, %v933
        %v997 = vpack.c.b16 %v934, %v934
        %v998 = vpack.c.b16 %v935, %v935
        %v999 = vpack.c.b16 %v936, %v936
        %1063 = vst [vmem:[%s208] sm:$0xf] %v937
        %1064 = vst [vmem:[%s208 + $0x4] sm:$0xf] %v938
        %1065 = vst [vmem:[%s208 + $0x8] sm:$0xf] %v939
        %1066 = vst [vmem:[%s208 + $0xc] sm:$0xf] %v940
        %1067 = vst [vmem:[%s208 + $0x10] sm:$0xf] %v941
        %1068 = vst [vmem:[%s208 + $0x14] sm:$0xf] %v942
        %1069 = vst [vmem:[%s208 + $0x18] sm:$0xf] %v943
        %1070 = vst [vmem:[%s208 + $0x1c] sm:$0xf] %v944
        %1071 = vst [vmem:[%s208 + $0x20] sm:$0xf] %v945
        %1072 = vst [vmem:[%s208 + $0x24] sm:$0xf] %v946
        %1073 = vst [vmem:[%s208 + $0x28] sm:$0xf] %v947
        %1074 = vst [vmem:[%s208 + $0x2c] sm:$0xf] %v948
        %1075 = vst [vmem:[%s208 + $0x30] sm:$0xf] %v949
        %1076 = vst [vmem:[%s208 + $0x34] sm:$0xf] %v950
        %1077 = vst [vmem:[%s208 + $0x38] sm:$0xf] %v951
        %1078 = vst [vmem:[%s208 + $0x3c] sm:$0xf] %v952
        %1079 = vst [vmem:[%s208 + $0x40] sm:$0xf] %v953
        %1080 = vst [vmem:[%s208 + $0x44] sm:$0xf] %v954
        %1081 = vst [vmem:[%s208 + $0x48] sm:$0xf] %v955
        %1082 = vst [vmem:[%s208 + $0x4c] sm:$0xf] %v956
        %1083 = vst [vmem:[%s208 + $0x50] sm:$0xf] %v957
        %1084 = vst [vmem:[%s208 + $0x54] sm:$0xf] %v958
        %1085 = vst [vmem:[%s208 + $0x58] sm:$0xf] %v959
        %1086 = vst [vmem:[%s208 + $0x5c] sm:$0xf] %v960
        %1087 = vst [vmem:[%s208 + $0x60] sm:$0xf] %v961
        %1088 = vst [vmem:[%s208 + $0x64] sm:$0xf] %v962
        %1089 = vst [vmem:[%s208 + $0x68] sm:$0xf] %v963
        %1090 = vst [vmem:[%s208 + $0x6c] sm:$0xf] %v964
        %1091 = vst [vmem:[%s208 + $0x70] sm:$0xf] %v965
        %1092 = vst [vmem:[%s208 + $0x74] sm:$0xf] %v966
        %1093 = vst [vmem:[%s208 + $0x78] sm:$0xf] %v967
        %1094 = vst [vmem:[%s208 + $0x7c] sm:$0xf] %v968
        %1095 = vst [vmem:[%s208 + $0x80] sm:$0xf] %v969
        %1096 = vst [vmem:[%s208 + $0x84] sm:$0xf] %v970
        %1097 = vst [vmem:[%s208 + $0x88] sm:$0xf] %v971
        %1098 = vst [vmem:[%s208 + $0x8c] sm:$0xf] %v972
        %1099 = vst [vmem:[%s208 + $0x90] sm:$0xf] %v973
        %1100 = vst [vmem:[%s208 + $0x94] sm:$0xf] %v974
        %1101 = vst [vmem:[%s208 + $0x98] sm:$0xf] %v975
        %1102 = vst [vmem:[%s208 + $0x9c] sm:$0xf] %v976
        %1103 = vst [vmem:[%s208 + $0xa0] sm:$0xf] %v977
        %1104 = vst [vmem:[%s208 + $0xa4] sm:$0xf] %v978
        %1105 = vst [vmem:[%s208 + $0xa8] sm:$0xf] %v979
        %1106 = vst [vmem:[%s208 + $0xac] sm:$0xf] %v980
        %1107 = vst [vmem:[%s208 + $0xb0] sm:$0xf] %v981
        %1108 = vst [vmem:[%s208 + $0xb4] sm:$0xf] %v982
        %1109 = vst [vmem:[%s208 + $0xb8] sm:$0xf] %v983
        %1110 = vst [vmem:[%s208 + $0xbc] sm:$0xf] %v984
        %1111 = vst [vmem:[%s208 + $0xc0] sm:$0xf] %v985
        %1112 = vst [vmem:[%s208 + $0xc4] sm:$0xf] %v986
        %1113 = vst [vmem:[%s208 + $0xc8] sm:$0xf] %v987
        %1114 = vst [vmem:[%s208 + $0xcc] sm:$0xf] %v988
        %1115 = vst [vmem:[%s208 + $0xd0] sm:$0xf] %v989
        %1116 = vst [vmem:[%s208 + $0xd4] sm:$0xf] %v990
        %1117 = vst [vmem:[%s208 + $0xd8] sm:$0xf] %v991
        %1118 = vst [vmem:[%s208 + $0xdc] sm:$0xf] %v992
        %1119 = vst [vmem:[%s208 + $0xe0] sm:$0xf] %v993
        %1120 = vst [vmem:[%s208 + $0xe4] sm:$0xf] %v994
        %1121 = vst [vmem:[%s208 + $0xe8] sm:$0xf] %v995
        %1122 = vst [vmem:[%s208 + $0xec] sm:$0xf] %v996
        %1123 = vst [vmem:[%s208 + $0xf0] sm:$0xf] %v997
        %1124 = vst [vmem:[%s208 + $0xf4] sm:$0xf] %v998
        %1125 = vst [vmem:[%s208 + $0xf8] sm:$0xf] %v999
        %s1126 = sand.u32 %s102, 1
        %s1127 = scalar_lea.sflag [#allocation6], %s1126
        %s1128 = sand.u32 %s102, 1
        %s1129 = smul.addr %s1128, 252
        %s1130 = scalar_lea.vmem [#allocation9], %s1129
        // Predicated region
        $region41: #{tpu_custom_call.1} parent=31 // pred_check
          %p1131 = pneg %p112
        $region42: #{tpu_custom_call.1} parent=31 // pred_check_branch
          %1133 = sbr.rel (%p1131) target = $region44
        $region43: #{tpu_custom_call.1} parent=31 // pred_region
          %s1134 = smul.u32 63, %s26
          %s1136 = ssub.s32 4032, 4032
          %1137 = vsyncadd %s1127, %s1136
          %s1138 = smul.addr %s1134, 64
          %s1139 = scalar_lea.hbm %s4, %s1138
          %s1140 = sshll.u32 %s1130, 4
          %s1141 = int_to_ptr.vmem [resolvable:$true] %s1140
          %1146 = dma.vmem_to_hbm [thread:$0]  %s1141, 4032, %s1139, %s1127, 64, 64, 4
        $region44: #{tpu_custom_call.1} parent=31 // pred_fallthru
          _
      $region32: #{tpu_custom_call.1} parent=5 // pred_fallthru
        _
      %p1147 = scmp.le.s32.totalorder 2, %s21
      // Predicated region
      $region45: #{tpu_custom_call.1} parent=5 // pred_check
        %p1148 = pneg %p1147
      $region46: #{tpu_custom_call.1} parent=5 // pred_check_branch
        %1150 = sbr.rel (%p1148) target = $region48
      $region47: #{tpu_custom_call.1} parent=5 // pred_region
        %s1151 = ssub.s32 %s21, 2
        // Predicated region
        $region49: #{tpu_custom_call.1} parent=47 // pred_check
          %p1152 = pneg %p118
        $region50: #{tpu_custom_call.1} parent=47 // pred_check_branch
          %1154 = sbr.rel (%p1152) target = $region52
        $region51: #{tpu_custom_call.1} parent=47 // pred_region
          %s1155 = sand.u32 %s103, 1
          %s1156 = scalar_lea.sflag [#allocation6], %s1155
          %s1157 = sand.u32 %s103, 1
          %s1158 = smul.addr %s1157, 252
          %s1159 = scalar_lea.vmem [#allocation9], %s1158
          %1160 = dma.done %s1156, 4032
        $region52: #{tpu_custom_call.1} parent=47 // pred_fallthru
          _
      $region48: #{tpu_custom_call.1} parent=5 // pred_fallthru
        _
    $region6: #{tpu_custom_call.1} parent=1 // loop_footer
      %s25 = sadd.s32 1, %s21
    $region7: #{tpu_custom_call.1} parent=1 // loop_footer_branch
      %20 = sbr.rel target = $region3
    $region8: #{tpu_custom_call.1} parent=1 // loop_exit
      _
    %1161 = vsyncpa [#allocation5], 1
    %s1162 = scalar_lea.sflag [#allocation5], 1
    %1163 = vsyncpa %s1162, 1
    %1164 = vsyncpa [#allocation8], 1
    %1165 = vsyncpa [#allocation6], 1
    %s1166 = scalar_lea.sflag [#allocation6], 1
    %1167 = vsyncpa %s1166, 1

</llo_original>
